<compile_context>
chip_gen: v7x
topology: tpu7x:2x2x1
jax: 0.10.0
libtpu: 0.0.40
codegen_flags: <defaults>
</compile_context>

<pallas_src>
import numpy as np
import jax
import jax.numpy as jnp
from jax.experimental import pallas as pl
from jax.experimental.pallas import tpu as pltpu


def _round_up(n, m):
    return ((n + m - 1) // m) * m


def _erf(x):
    # Abramowitz & Stegun 7.1.26 rational approximation (max abs err ~1.5e-7);
    # exact-erf GELU semantics (nn.GELU default), lowered via exp + EUP recip.
    a1, a2, a3, a4, a5 = 0.254829592, -0.284496736, 1.421413741, -1.453152027, 1.061405429
    p = 0.3275911
    s = jnp.where(x >= 0, 1.0, -1.0)
    ax = jnp.abs(x)
    # EUP approximate reciprocal (separate bundle slot) instead of a VALU divide.
    t = pl.reciprocal(1.0 + p * ax, approx=True)
    poly = ((((a5 * t + a4) * t + a3) * t + a2) * t + a1) * t
    return s * (1.0 - poly * jnp.exp(-ax * ax))


def _gelu_exact(x):
    # nn.GELU() default = exact erf formulation.
    return 0.5 * x * (1.0 + _erf(x * (1.0 / np.sqrt(2.0))))


def _ff_kernel(xt_ref, w1_ref, b1_ref, w2_ref, b2_ref, o_ref):
    # xt: (Din, TM) with rows on the 128-lane axis; cast after DMA (in VMEM).
    xt = xt_ref[...].astype(jnp.float32)
    h = jnp.dot(w1_ref[...], xt, preferred_element_type=jnp.float32) + b1_ref[...]
    h = _gelu_exact(h)                                             # (Dh, TM), lane-dense
    y = jnp.dot(w2_ref[...], h, preferred_element_type=jnp.float32) + b2_ref[...]
    # TODO(synk): nn.Dropout has p=0.0 in this module config -> identity
    # (eval semantics); no RNG masking emitted.
    o_ref[...] = y.astype(o_ref.dtype)                             # dense (Din, TM) store


def feedforward_forward(x, params, *, block_rows=8192):
    """y = Linear2(GELU(Linear1(x))); arbitrary leading dims, last dim = in_channels."""
    orig_shape = x.shape
    din = orig_shape[-1]
    rows = int(np.prod(orig_shape[:-1]))
    dh, din_w = params["w1"].shape                                  # PyTorch (out, in) layout
    assert din_w == din and params["w2"].shape == (din, dh)

    # Lane-dense layout: rows on the lane axis (wrapper transpose = layout plumbing).
    xt = x.reshape(rows, din).T                                     # (Din, rows), native dtype

    # Tile the row/lane axis.
    if rows < 128:
        tm = rows                                                   # full-extent block (allowed)
    else:
        # Lane-aligned (multiple of 128), capped by block_rows, and sized so the
        # grid has >= 2 steps when possible -> both v7x TensorCores get work.
        tm = max(128, min(_round_up(block_rows, 128), _round_up(pl.cdiv(rows, 2), 128)))
    grid = (pl.cdiv(rows, tm),)

    # VMEM budget: double-buffered in/out tiles + hidden tile + resident weights.
    f32 = jnp.dtype(jnp.float32).itemsize
    in_bytes = din * tm * jnp.dtype(x.dtype).itemsize
    out_bytes = din * tm * f32
    hid_bytes = dh * tm * f32
    w_bytes = (2 * din * dh + din + dh) * f32
    vmem_need = 2 * (in_bytes + out_bytes + hid_bytes) + w_bytes + (4 << 20)
    vmem_limit = int(min(max(vmem_need, 32 << 20), 64 << 20))       # never assume 128 MiB (v7x!)

    out_t = pl.pallas_call(
        _ff_kernel,
        out_shape=jax.ShapeDtypeStruct((din, rows), jnp.float32),
        grid_spec=pltpu.PrefetchScalarGridSpec(
            num_scalar_prefetch=0,
            grid=grid,
            in_specs=[
                pl.BlockSpec((din, tm), lambda i: (0, i)),          # activations (streamed)
                pl.BlockSpec((dh, din), lambda i: (0, 0)),          # w1 (VMEM-resident)
                pl.BlockSpec((dh, 1), lambda i: (0, 0)),            # b1
                pl.BlockSpec((din, dh), lambda i: (0, 0)),          # w2 (VMEM-resident)
                pl.BlockSpec((din, 1), lambda i: (0, 0)),           # b2
            ],
            out_specs=pl.BlockSpec((din, tm), lambda i: (0, i)),    # lane-dense output slab
        ),
        compiler_params=pltpu.CompilerParams(
            dimension_semantics=("parallel",),
            vmem_limit_bytes=vmem_limit,
        ),
    )(xt, params["w1"], params["b1"], params["w2"], params["b2"])
    return out_t.T.reshape(orig_shape)


def init_params(key, in_channels, hid_channels):
    # PyTorch-style Linear init (uniform +/- 1/sqrt(fan_in)); weights stored in
    # PyTorch (out, in) layout, which is exactly what the transposed kernel needs.
    k1, k2, k3, k4 = jax.random.split(key, 4)
    bound1 = 1.0 / np.sqrt(in_channels)
    bound2 = 1.0 / np.sqrt(hid_channels)
    return {
        "w1": jax.random.uniform(k1, (hid_channels, in_channels), jnp.float32, -bound1, bound1),
        "b1": jax.random.uniform(k2, (hid_channels, 1), jnp.float32, -bound1, bound1),
        "w2": jax.random.uniform(k3, (in_channels, hid_channels), jnp.float32, -bound2, bound2),
        "b2": jax.random.uniform(k4, (in_channels, 1), jnp.float32, -bound2, bound2),
    }


def feedforward_reference(x, params):
    """Pure-JAX reference mirroring the PyTorch forward (for validation)."""
    h = x @ params["w1"].T + params["b1"][:, 0]
    h = jax.nn.gelu(h, approximate=False)                          # exact erf GELU (nn.GELU default)
    return h @ params["w2"].T + params["b2"][:, 0]


if __name__ == "__main__":
    key = jax.random.PRNGKey(0)
    kx1, kx2, kp = jax.random.split(key, 3)

    # Shapes implied by the ArjunViT usage: tokens of width in_channels=32,
    # FeedForward hidden width 64, dropout=0.0.
    IN_CH, HID_CH = 32, 64
    params = init_params(kp, IN_CH, HID_CH)

    # Small case: (batch=2, tokens=8) -> single full-extent tile.
    x_small = jax.random.normal(kx1, (2, 8, IN_CH), dtype=jnp.float32)
    y_small = jax.block_until_ready(feedforward_forward(x_small, params))
    np.testing.assert_allclose(
        np.asarray(y_small), np.asarray(feedforward_reference(x_small, params)),
        rtol=3e-3, atol=3e-3)

    # Second case exercising the multi-step "parallel" grid (256 rows -> 2 tiles of 128).
    x_big = jax.random.normal(kx2, (2, 128, IN_CH), dtype=jnp.float32)
    y_big = jax.block_until_ready(feedforward_forward(x_big, params))
    np.testing.assert_allclose(
        np.asarray(y_big), np.asarray(feedforward_reference(x_big, params)),
        rtol=3e-3, atol=3e-3)

    print("KERNEL_OK")
</pallas_src>

<mosaic_0001>
module attributes {stable_mosaic.version = 11 : i64} {
  func.func @_ff_kernel(%arg0: i32, %arg1: memref<32x16xf32, #tpu.memory_space<vmem>>, %arg2: memref<64x32xf32, #tpu.memory_space<vmem>>, %arg3: memref<64x1xf32, #tpu.memory_space<vmem>>, %arg4: memref<32x64xf32, #tpu.memory_space<vmem>>, %arg5: memref<32x1xf32, #tpu.memory_space<vmem>>, %arg6: memref<32x16xf32, #tpu.memory_space<vmem>>) attributes {dimension_semantics = [#tpu.dimension_semantics<parallel>], iteration_bounds = array<i64: 1>, scalar_prefetch = 0 : i64, scratch_operands = 0 : i64, tpu.core_type = #tpu.core_type<tc>, window_params = [{transform_indices = @transform_0, window_bounds = array<i64: 32, 16>}, {pipeline_mode = #tpu.pipeline_mode<synchronous>, transform_indices = @transform_1, window_bounds = array<i64: 64, 32>}, {pipeline_mode = #tpu.pipeline_mode<synchronous>, transform_indices = @transform_2, window_bounds = array<i64: 64, 1>}, {pipeline_mode = #tpu.pipeline_mode<synchronous>, transform_indices = @transform_3, window_bounds = array<i64: 32, 64>}, {pipeline_mode = #tpu.pipeline_mode<synchronous>, transform_indices = @transform_4, window_bounds = array<i64: 32, 1>}, {transform_indices = @transform_5, window_bounds = array<i64: 32, 16>}]} {
    %c0 = arith.constant 0 : index
    %c0_0 = arith.constant 0 : index
    %0 = vector.load %arg1[%c0, %c0_0] : memref<32x16xf32, #tpu.memory_space<vmem>>, vector<32x16xf32>
    %c0_1 = arith.constant 0 : index
    %c0_2 = arith.constant 0 : index
    %1 = vector.load %arg2[%c0_1, %c0_2] : memref<64x32xf32, #tpu.memory_space<vmem>>, vector<64x32xf32>
    %cst = arith.constant dense<0.000000e+00> : vector<64x16xf32>
    %2 = tpu.matmul %1, %0, %cst {dimension_numbers = #tpu.dot_dimension_numbers<[1], [0], [0], [1], [0, 0, 1, 1], [], []>} : vector<64x32xf32>, vector<32x16xf32>, vector<64x16xf32> -> vector<64x16xf32>
    %c0_3 = arith.constant 0 : index
    %c0_4 = arith.constant 0 : index
    %3 = vector.load %arg3[%c0_3, %c0_4] : memref<64x1xf32, #tpu.memory_space<vmem>>, vector<64x1xf32>
    %4 = vector.broadcast %3 : vector<64x1xf32> to vector<64x16xf32>
    %5 = arith.addf %2, %4 : vector<64x16xf32>
    %cst_5 = arith.constant 5.000000e-01 : f32
    %6 = vector.broadcast %cst_5 : f32 to vector<64x16xf32>
    %7 = arith.mulf %6, %5 : vector<64x16xf32>
    %cst_6 = arith.constant 0.707106769 : f32
    %8 = vector.broadcast %cst_6 : f32 to vector<64x16xf32>
    %9 = arith.mulf %5, %8 : vector<64x16xf32>
    %cst_7 = arith.constant 0.000000e+00 : f32
    %10 = vector.broadcast %cst_7 : f32 to vector<64x16xf32>
    %11 = arith.cmpf oge, %9, %10 : vector<64x16xf32>
    %cst_8 = arith.constant 1.000000e+00 : f32
    %cst_9 = arith.constant -1.000000e+00 : f32
    %12 = vector.broadcast %cst_8 : f32 to vector<64x16xf32>
    %13 = vector.broadcast %cst_9 : f32 to vector<64x16xf32>
    %14 = arith.select %11, %12, %13 : vector<64x16xi1>, vector<64x16xf32>
    %15 = math.absf %9 : vector<64x16xf32>
    %cst_10 = arith.constant 0.327591091 : f32
    %16 = vector.broadcast %cst_10 : f32 to vector<64x16xf32>
    %17 = arith.mulf %16, %15 : vector<64x16xf32>
    %cst_11 = arith.constant 1.000000e+00 : f32
    %18 = vector.broadcast %cst_11 : f32 to vector<64x16xf32>
    %19 = arith.addf %18, %17 : vector<64x16xf32>
    %20 = tpu.reciprocal %19 {approx = true} : vector<64x16xf32> -> vector<64x16xf32>
    %cst_12 = arith.constant 1.06140542 : f32
    %21 = vector.broadcast %cst_12 : f32 to vector<64x16xf32>
    %22 = arith.mulf %21, %20 : vector<64x16xf32>
    %cst_13 = arith.constant -1.45315206 : f32
    %23 = vector.broadcast %cst_13 : f32 to vector<64x16xf32>
    %24 = arith.addf %22, %23 : vector<64x16xf32>
    %25 = arith.mulf %24, %20 : vector<64x16xf32>
    %cst_14 = arith.constant 1.42141378 : f32
    %26 = vector.broadcast %cst_14 : f32 to vector<64x16xf32>
    %27 = arith.addf %25, %26 : vector<64x16xf32>
    %28 = arith.mulf %27, %20 : vector<64x16xf32>
    %cst_15 = arith.constant -0.284496725 : f32
    %29 = vector.broadcast %cst_15 : f32 to vector<64x16xf32>
    %30 = arith.addf %28, %29 : vector<64x16xf32>
    %31 = arith.mulf %30, %20 : vector<64x16xf32>
    %cst_16 = arith.constant 0.254829586 : f32
    %32 = vector.broadcast %cst_16 : f32 to vector<64x16xf32>
    %33 = arith.addf %31, %32 : vector<64x16xf32>
    %34 = arith.mulf %33, %20 : vector<64x16xf32>
    %cst_17 = arith.constant 0.000000e+00 : f32
    %35 = vector.broadcast %cst_17 : f32 to vector<64x16xf32>
    %36 = arith.subf %35, %15 : vector<64x16xf32>
    %37 = arith.mulf %36, %15 : vector<64x16xf32>
    %38 = math.exp %37 : vector<64x16xf32>
    %39 = arith.mulf %34, %38 : vector<64x16xf32>
    %cst_18 = arith.constant 1.000000e+00 : f32
    %40 = vector.broadcast %cst_18 : f32 to vector<64x16xf32>
    %41 = arith.subf %40, %39 : vector<64x16xf32>
    %42 = arith.mulf %14, %41 : vector<64x16xf32>
    %cst_19 = arith.constant 1.000000e+00 : f32
    %43 = vector.broadcast %cst_19 : f32 to vector<64x16xf32>
    %44 = arith.addf %43, %42 : vector<64x16xf32>
    %45 = arith.mulf %7, %44 : vector<64x16xf32>
    %c0_20 = arith.constant 0 : index
    %c0_21 = arith.constant 0 : index
    %46 = vector.load %arg4[%c0_20, %c0_21] : memref<32x64xf32, #tpu.memory_space<vmem>>, vector<32x64xf32>
    %cst_22 = arith.constant dense<0.000000e+00> : vector<32x16xf32>
    %47 = tpu.matmul %46, %45, %cst_22 {dimension_numbers = #tpu.dot_dimension_numbers<[1], [0], [0], [1], [0, 0, 1, 1], [], []>} : vector<32x64xf32>, vector<64x16xf32>, vector<32x16xf32> -> vector<32x16xf32>
    %c0_23 = arith.constant 0 : index
    %c0_24 = arith.constant 0 : index
    %48 = vector.load %arg5[%c0_23, %c0_24] : memref<32x1xf32, #tpu.memory_space<vmem>>, vector<32x1xf32>
    %49 = vector.broadcast %48 : vector<32x1xf32> to vector<32x16xf32>
    %50 = arith.addf %47, %49 : vector<32x16xf32>
    %c0_25 = arith.constant 0 : index
    %c0_26 = arith.constant 0 : index
    %51 = vector.load %arg6[%c0_25, %c0_26] : memref<32x16xf32, #tpu.memory_space<vmem>>, vector<32x16xf32>
    tpu.vector_store %arg6[%c0_25, %c0_26], %50 {strides = array<i32>} : memref<32x16xf32, #tpu.memory_space<vmem>>, vector<32x16xf32>,
    return
  }
  func.func @transform_0(%arg0: i32) -> (i32, i32) {
    %c0_i32 = arith.constant 0 : i32
    %c0_i32_0 = arith.constant 0 : i32
    return %c0_i32, %arg0 : i32, i32
  }
  func.func @transform_1(%arg0: i32) -> (i32, i32) {
    %c0_i32 = arith.constant 0 : i32
    %c0_i32_0 = arith.constant 0 : i32
    %c0_i32_1 = arith.constant 0 : i32
    return %c0_i32, %c0_i32_0 : i32, i32
  }
  func.func @transform_2(%arg0: i32) -> (i32, i32) {
    %c0_i32 = arith.constant 0 : i32
    %c0_i32_0 = arith.constant 0 : i32
    %c0_i32_1 = arith.constant 0 : i32
    return %c0_i32, %c0_i32_0 : i32, i32
  }
  func.func @transform_3(%arg0: i32) -> (i32, i32) {
    %c0_i32 = arith.constant 0 : i32
    %c0_i32_0 = arith.constant 0 : i32
    %c0_i32_1 = arith.constant 0 : i32
    return %c0_i32, %c0_i32_0 : i32, i32
  }
  func.func @transform_4(%arg0: i32) -> (i32, i32) {
    %c0_i32 = arith.constant 0 : i32
    %c0_i32_0 = arith.constant 0 : i32
    %c0_i32_1 = arith.constant 0 : i32
    return %c0_i32, %c0_i32_0 : i32, i32
  }
  func.func @transform_5(%arg0: i32) -> (i32, i32) {
    %c0_i32 = arith.constant 0 : i32
    %c0_i32_0 = arith.constant 0 : i32
    return %c0_i32, %arg0 : i32, i32
  }
}

</mosaic_0001>

<llo_original>
// kernel: tpu_custom_call.1
$region0: #{tpu_custom_call.1}
  #allocation0 [shape = 'u32[]', space=smem, size = 0x4, offset = 0x4, fixed_abs, tag = 'smem constant byte address 0x4 - core index']
  #allocation1 [shape = 'u32[144,128]{1,0:T(1,128)}', space=vmem, size = 0x12000, scoped, tag = 'internal scratch']
  %s0 = inlined_call_operand.vmem [shape: f32[32,16], index: 0, kind: input, shape index: {}]
  %s1 = inlined_call_operand.vmem [shape: f32[64,32], index: 1, kind: input, shape index: {}]
  %s2 = inlined_call_operand.vmem [shape: f32[64,1], index: 2, kind: input, shape index: {}]
  %s3 = inlined_call_operand.vmem [shape: f32[32,64], index: 3, kind: input, shape index: {}]
  %s4 = inlined_call_operand.vmem [shape: f32[32,1], index: 4, kind: input, shape index: {}]
  %s5 = inlined_call_operand.vmem [shape: f32[32,16], index: 5, kind: output, shape index: {}]
  %s6 = sld [smem:[#allocation0]]
  $region30: #{tpu_custom_call.1} parent=0
    _
  %s8 = ssub.s32 1, %s6
  %s9 = scalar_select 0, %s8, %s6
  // Predicated region
  $region2: #{tpu_custom_call.1} parent=0 // pred_check
    _
  $region3: #{tpu_custom_call.1} parent=0 // pred_check_branch
    %11 = sbr.rel (0) target = $region5
  $region4: #{tpu_custom_call.1} parent=0 // pred_region
    _
  $region5: #{tpu_custom_call.1} parent=0 // pred_fallthru
    _
  // Predicated region
  $region6: #{tpu_custom_call.1} parent=0 // pred_check
    _
  $region7: #{tpu_custom_call.1} parent=0 // pred_check_branch
    %13 = sbr.rel (0) target = $region9
  $region8: #{tpu_custom_call.1} parent=0 // pred_region
    _
  $region9: #{tpu_custom_call.1} parent=0 // pred_fallthru
    _
  // Predicated region
  $region10: #{tpu_custom_call.1} parent=0 // pred_check
    _
  $region11: #{tpu_custom_call.1} parent=0 // pred_check_branch
    %15 = sbr.rel (0) target = $region13
  $region12: #{tpu_custom_call.1} parent=0 // pred_region
    _
  $region13: #{tpu_custom_call.1} parent=0 // pred_fallthru
    _
  // Predicated region
  $region14: #{tpu_custom_call.1} parent=0 // pred_check
    _
  $region15: #{tpu_custom_call.1} parent=0 // pred_check_branch
    %17 = sbr.rel (0) target = $region17
  $region16: #{tpu_custom_call.1} parent=0 // pred_region
    _
  $region17: #{tpu_custom_call.1} parent=0 // pred_fallthru
    _
  // Predicated region
  $region18: #{tpu_custom_call.1} parent=0 // pred_check
    _
  $region19: #{tpu_custom_call.1} parent=0 // pred_check_branch
    %19 = sbr.rel (0) target = $region21
  $region20: #{tpu_custom_call.1} parent=0 // pred_region
    _
  $region21: #{tpu_custom_call.1} parent=0 // pred_fallthru
    _
  %v20 = vld [vmem:[%s0] sm:$0xff]
  %v21 = vld [vmem:[%s0 + $0x8] sm:$0xff]
  %v22 = vld [vmem:[%s0 + $0x10] sm:$0xff]
  %v23 = vld [vmem:[%s0 + $0x18] sm:$0xff]
  %v24 = vld [vmem:[%s1] sm:$0xff]
  %v25 = vld [vmem:[%s1 + $0x8] sm:$0xff]
  %v26 = vld [vmem:[%s1 + $0x10] sm:$0xff]
  %v27 = vld [vmem:[%s1 + $0x18] sm:$0xff]
  %v28 = vld [vmem:[%s1 + $0x20] sm:$0xff]
  %v29 = vld [vmem:[%s1 + $0x28] sm:$0xff]
  %v30 = vld [vmem:[%s1 + $0x30] sm:$0xff]
  %v31 = vld [vmem:[%s1 + $0x38] sm:$0xff]
  %v32 = vld [vmem:[%s2] sm:$0xff]
  %v33 = vld [vmem:[%s2 + $0x8] sm:$0xff]
  %v34 = vld [vmem:[%s2 + $0x10] sm:$0xff]
  %v35 = vld [vmem:[%s2 + $0x18] sm:$0xff]
  %v36 = vld [vmem:[%s2 + $0x20] sm:$0xff]
  %v37 = vld [vmem:[%s2 + $0x28] sm:$0xff]
  %v38 = vld [vmem:[%s2 + $0x30] sm:$0xff]
  %v39 = vld [vmem:[%s2 + $0x38] sm:$0xff]
  %41 = vset.pattern.permute.xlu0 0
  %42 = vperm.xlu0 %41, %v32
  %v43 = vpop.permute.xlu0 %42
  %46 = vset.pattern.permute.xlu0 0
  %47 = vperm.xlu0 %46, %v33
  %v48 = vpop.permute.xlu0 %47
  %51 = vset.pattern.permute.xlu0 0
  %52 = vperm.xlu0 %51, %v34
  %v53 = vpop.permute.xlu0 %52
  %56 = vset.pattern.permute.xlu0 0
  %57 = vperm.xlu0 %56, %v35
  %v58 = vpop.permute.xlu0 %57
  %61 = vset.pattern.permute.xlu0 0
  %62 = vperm.xlu0 %61, %v36
  %v63 = vpop.permute.xlu0 %62
  %66 = vset.pattern.permute.xlu0 0
  %67 = vperm.xlu0 %66, %v37
  %v68 = vpop.permute.xlu0 %67
  %71 = vset.pattern.permute.xlu0 0
  %72 = vperm.xlu0 %71, %v38
  %v73 = vpop.permute.xlu0 %72
  %76 = vset.pattern.permute.xlu0 0
  %77 = vperm.xlu0 %76, %v39
  %v78 = vpop.permute.xlu0 %77
  %vm80 = vcmask 261120
  %v82 = vsel %vm80, %v24, 0
  %v85 = vsel %vm80, %v25, 0
  %v88 = vsel %vm80, %v26, 0
  %v91 = vsel %vm80, %v27, 0
  %v94 = vsel %vm80, %v28, 0
  %v97 = vsel %vm80, %v29, 0
  %v100 = vsel %vm80, %v30, 0
  %v103 = vsel %vm80, %v31, 0
  %105 = vmatprep.subr.mxu0 0.0
  %106 = vmatpush1.msra.mxu0 %v20
  %107 = vmatprep.subr.mxu0 0.0
  %108 = vmatpush1.msra.mxu0 %v21
  %109 = vmatprep.subr.mxu0 0.0
  %110 = vmatpush1.msra.mxu0 %v22
  %111 = vmatprep.subr.mxu0 0.0
  %112 = vmatpush1.msra.mxu0 %v23
  %113 = vmatprep.subr.mxu0 0.0
  %114 = vmatpush1.msra.mxu0 0.0
  %115 = vmatprep.subr.mxu0 0.0
  %116 = vmatpush1.msra.mxu0 0.0
  %117 = vmatprep.subr.mxu0 0.0
  %118 = vmatpush1.msra.mxu0 0.0
  %119 = vmatprep.subr.mxu0 0.0
  %120 = vmatpush1.msra.mxu0 0.0
  %121 = vmatprep.subr.mxu0 0.0
  %122 = vmatpush1.msra.mxu0 0.0
  %123 = vmatprep.subr.mxu0 0.0
  %124 = vmatpush1.msra.mxu0 0.0
  %125 = vmatprep.subr.mxu0 0.0
  %126 = vmatpush1.msra.mxu0 0.0
  %127 = vmatprep.subr.mxu0 0.0
  %128 = vmatpush1.msra.mxu0 0.0
  %129 = vmatprep.subr.mxu0 0.0
  %130 = vmatpush1.msra.mxu0 0.0
  %131 = vmatprep.subr.mxu0 0.0
  %132 = vmatpush1.msra.mxu0 0.0
  %133 = vmatprep.subr.mxu0 0.0
  %134 = vmatpush1.msra.mxu0 0.0
  %135 = vmatprep.subr.mxu0 0.0
  %136 = vmatpush1.msra.mxu0 0.0
  %137 = vmatprep.subr.mxu0 0.0
  %138 = vmatpush1.msra.mxu0 0.0
  %139 = vmatprep.subr.mxu0 0.0
  %140 = vmatpush1.msra.mxu0 0.0
  %141 = vmatprep.subr.mxu0 0.0
  %142 = vmatpush1.msra.mxu0 0.0
  %143 = vmatprep.subr.mxu0 0.0
  %144 = vmatpush1.msra.mxu0 0.0
  %145 = vmatprep.subr.mxu0 0.0
  %146 = vmatpush1.msra.mxu0 0.0
  %147 = vmatprep.subr.mxu0 0.0
  %148 = vmatpush1.msra.mxu0 0.0
  %149 = vmatprep.subr.mxu0 0.0
  %150 = vmatpush1.msra.mxu0 0.0
  %151 = vmatprep.subr.mxu0 0.0
  %152 = vmatpush1.msra.mxu0 0.0
  %153 = vmatprep.subr.mxu0 0.0
  %154 = vmatpush1.msra.mxu0 0.0
  %155 = vmatprep.subr.mxu0 0.0
  %156 = vmatpush1.msra.mxu0 0.0
  %157 = vmatprep.subr.mxu0 0.0
  %158 = vmatpush1.msra.mxu0 0.0
  %159 = vmatprep.subr.mxu0 0.0
  %160 = vmatpush1.msra.mxu0 0.0
  %161 = vmatprep.subr.mxu0 0.0
  %162 = vmatpush1.msra.mxu0 0.0
  %163 = vmatprep.subr.mxu0 0.0
  %164 = vmatpush1.msra.mxu0 0.0
  %165 = vmatprep.subr.mxu0 0.0
  %166 = vmatpush1.msra.mxu0 0.0
  %167 = vmatprep.subr.mxu0 0.0
  %168 = vmatpush1.msra.mxu0 0.0
  %169 = vmatprep.mubr.f32.mxu0 0.0
  %170 = vmatmul.mubr.f32.gmra.mrb[0].mxu0 %v82
  %v171 = vpop.f32.mrb[0].mxu0
  %v172 = vadd.f32 %v43, %v171
  %v173 = vpop.f32.mrb[0].mxu0
  %174 = vmatprep.mubr.f32.mxu0 0.0
  %175 = vmatmul.mubr.f32.gmra.mrb[0].mxu0 %v85
  %v176 = vpop.f32.mrb[0].mxu0
  %v177 = vadd.f32 %v48, %v176
  %v178 = vpop.f32.mrb[0].mxu0
  %179 = vmatprep.mubr.f32.mxu0 0.0
  %180 = vmatmul.mubr.f32.gmra.mrb[0].mxu0 %v88
  %v181 = vpop.f32.mrb[0].mxu0
  %v182 = vadd.f32 %v53, %v181
  %v183 = vpop.f32.mrb[0].mxu0
  %184 = vmatprep.mubr.f32.mxu0 0.0
  %185 = vmatmul.mubr.f32.gmra.mrb[0].mxu0 %v91
  %v186 = vpop.f32.mrb[0].mxu0
  %v187 = vadd.f32 %v58, %v186
  %v188 = vpop.f32.mrb[0].mxu0
  %189 = vmatprep.mubr.f32.mxu0 0.0
  %190 = vmatmul.mubr.f32.gmra.mrb[0].mxu0 %v94
  %v191 = vpop.f32.mrb[0].mxu0
  %v192 = vadd.f32 %v63, %v191
  %v193 = vpop.f32.mrb[0].mxu0
  %194 = vmatprep.mubr.f32.mxu0 0.0
  %195 = vmatmul.mubr.f32.gmra.mrb[0].mxu0 %v97
  %v196 = vpop.f32.mrb[0].mxu0
  %v197 = vadd.f32 %v68, %v196
  %v198 = vpop.f32.mrb[0].mxu0
  %199 = vmatprep.mubr.f32.mxu0 0.0
  %200 = vmatmul.mubr.f32.gmra.mrb[0].mxu0 %v100
  %v201 = vpop.f32.mrb[0].mxu0
  %v202 = vadd.f32 %v73, %v201
  %v203 = vpop.f32.mrb[0].mxu0
  %204 = vmatprep.mubr.f32.mxu0 0.0
  %205 = vmatmul.mubr.f32.gmra.mrb[0].mxu0 %v103
  %v206 = vpop.f32.mrb[0].mxu0
  %v207 = vadd.f32 %v78, %v206
  %v208 = vpop.f32.mrb[0].mxu0
  %209 = vdwg.mxu0
  %v210 = vmul.f32 %v172, 0.5
  %v211 = vmul.f32 %v177, 0.5
  %v212 = vmul.f32 %v182, 0.5
  %v213 = vmul.f32 %v187, 0.5
  %v214 = vmul.f32 %v192, 0.5
  %v215 = vmul.f32 %v197, 0.5
  %v216 = vmul.f32 %v202, 0.5
  %v217 = vmul.f32 %v207, 0.5
  %v218 = vmul.f32 %v172, 0.70710677
  %v219 = vmul.f32 %v177, 0.70710677
  %v220 = vmul.f32 %v182, 0.70710677
  %v221 = vmul.f32 %v187, 0.70710677
  %v222 = vmul.f32 %v192, 0.70710677
  %v223 = vmul.f32 %v197, 0.70710677
  %v224 = vmul.f32 %v202, 0.70710677
  %v225 = vmul.f32 %v207, 0.70710677
  %vm226 = vcmp.ge.f32.partialorder %v218, 0.0
  %vm227 = vcmp.ge.f32.partialorder %v219, 0.0
  %vm228 = vcmp.ge.f32.partialorder %v220, 0.0
  %vm229 = vcmp.ge.f32.partialorder %v221, 0.0
  %vm230 = vcmp.ge.f32.partialorder %v222, 0.0
  %vm231 = vcmp.ge.f32.partialorder %v223, 0.0
  %vm232 = vcmp.ge.f32.partialorder %v224, 0.0
  %vm233 = vcmp.ge.f32.partialorder %v225, 0.0
  %v234 = vsel %vm226, 1.0, -1.0
  %v235 = vsel %vm227, 1.0, -1.0
  %v236 = vsel %vm228, 1.0, -1.0
  %v237 = vsel %vm229, 1.0, -1.0
  %v238 = vsel %vm230, 1.0, -1.0
  %v239 = vsel %vm231, 1.0, -1.0
  %v240 = vsel %vm232, 1.0, -1.0
  %v241 = vsel %vm233, 1.0, -1.0
  %v242 = vand.u32 2147483647, %v218
  %v243 = vand.u32 2147483647, %v219
  %v244 = vand.u32 2147483647, %v220
  %v245 = vand.u32 2147483647, %v221
  %v246 = vand.u32 2147483647, %v222
  %v247 = vand.u32 2147483647, %v223
  %v248 = vand.u32 2147483647, %v224
  %v249 = vand.u32 2147483647, %v225
  %v250 = vmul.f32 %v242, 0.3275911
  %v251 = vmul.f32 %v243, 0.3275911
  %v252 = vmul.f32 %v244, 0.3275911
  %v253 = vmul.f32 %v245, 0.3275911
  %v254 = vmul.f32 %v246, 0.3275911
  %v255 = vmul.f32 %v247, 0.3275911
  %v256 = vmul.f32 %v248, 0.3275911
  %v257 = vmul.f32 %v249, 0.3275911
  %v258 = vadd.f32 %v250, 1.0
  %v259 = vadd.f32 %v251, 1.0
  %v260 = vadd.f32 %v252, 1.0
  %v261 = vadd.f32 %v253, 1.0
  %v262 = vadd.f32 %v254, 1.0
  %v263 = vadd.f32 %v255, 1.0
  %v264 = vadd.f32 %v256, 1.0
  %v265 = vadd.f32 %v257, 1.0
  %v266 = vrcp.pop %v258
  %v267 = vrcp.pop %v259
  %v268 = vrcp.pop %v260
  %v269 = vrcp.pop %v261
  %v270 = vrcp.pop %v262
  %v271 = vrcp.pop %v263
  %v272 = vrcp.pop %v264
  %v273 = vrcp.pop %v265
  %v274 = vmul.f32 %v266, 1.0614054
  %v275 = vmul.f32 %v267, 1.0614054
  %v276 = vmul.f32 %v268, 1.0614054
  %v277 = vmul.f32 %v269, 1.0614054
  %v278 = vmul.f32 %v270, 1.0614054
  %v279 = vmul.f32 %v271, 1.0614054
  %v280 = vmul.f32 %v272, 1.0614054
  %v281 = vmul.f32 %v273, 1.0614054
  %v282 = vadd.f32 %v274, -1.4531521
  %v283 = vadd.f32 %v275, -1.4531521
  %v284 = vadd.f32 %v276, -1.4531521
  %v285 = vadd.f32 %v277, -1.4531521
  %v286 = vadd.f32 %v278, -1.4531521
  %v287 = vadd.f32 %v279, -1.4531521
  %v288 = vadd.f32 %v280, -1.4531521
  %v289 = vadd.f32 %v281, -1.4531521
  %v290 = vmul.f32 %v282, %v266
  %v291 = vmul.f32 %v283, %v267
  %v292 = vmul.f32 %v284, %v268
  %v293 = vmul.f32 %v285, %v269
  %v294 = vmul.f32 %v286, %v270
  %v295 = vmul.f32 %v287, %v271
  %v296 = vmul.f32 %v288, %v272
  %v297 = vmul.f32 %v289, %v273
  %v298 = vadd.f32 %v290, 1.4214138
  %v299 = vadd.f32 %v291, 1.4214138
  %v300 = vadd.f32 %v292, 1.4214138
  %v301 = vadd.f32 %v293, 1.4214138
  %v302 = vadd.f32 %v294, 1.4214138
  %v303 = vadd.f32 %v295, 1.4214138
  %v304 = vadd.f32 %v296, 1.4214138
  %v305 = vadd.f32 %v297, 1.4214138
  %v306 = vmul.f32 %v298, %v266
  %v307 = vmul.f32 %v299, %v267
  %v308 = vmul.f32 %v300, %v268
  %v309 = vmul.f32 %v301, %v269
  %v310 = vmul.f32 %v302, %v270
  %v311 = vmul.f32 %v303, %v271
  %v312 = vmul.f32 %v304, %v272
  %v313 = vmul.f32 %v305, %v273
  %v314 = vadd.f32 %v306, -0.28449672
  %v315 = vadd.f32 %v307, -0.28449672
  %v316 = vadd.f32 %v308, -0.28449672
  %v317 = vadd.f32 %v309, -0.28449672
  %v318 = vadd.f32 %v310, -0.28449672
  %v319 = vadd.f32 %v311, -0.28449672
  %v320 = vadd.f32 %v312, -0.28449672
  %v321 = vadd.f32 %v313, -0.28449672
  %v322 = vmul.f32 %v314, %v266
  %v323 = vmul.f32 %v315, %v267
  %v324 = vmul.f32 %v316, %v268
  %v325 = vmul.f32 %v317, %v269
  %v326 = vmul.f32 %v318, %v270
  %v327 = vmul.f32 %v319, %v271
  %v328 = vmul.f32 %v320, %v272
  %v329 = vmul.f32 %v321, %v273
  %v330 = vadd.f32 %v322, 0.2548296
  %v331 = vadd.f32 %v323, 0.2548296
  %v332 = vadd.f32 %v324, 0.2548296
  %v333 = vadd.f32 %v325, 0.2548296
  %v334 = vadd.f32 %v326, 0.2548296
  %v335 = vadd.f32 %v327, 0.2548296
  %v336 = vadd.f32 %v328, 0.2548296
  %v337 = vadd.f32 %v329, 0.2548296
  %v338 = vmul.f32 %v330, %v266
  %v339 = vmul.f32 %v331, %v267
  %v340 = vmul.f32 %v332, %v268
  %v341 = vmul.f32 %v333, %v269
  %v342 = vmul.f32 %v334, %v270
  %v343 = vmul.f32 %v335, %v271
  %v344 = vmul.f32 %v336, %v272
  %v345 = vmul.f32 %v337, %v273
  %v346 = vsub.f32 0.0, %v242
  %v347 = vsub.f32 0.0, %v243
  %v348 = vsub.f32 0.0, %v244
  %v349 = vsub.f32 0.0, %v245
  %v350 = vsub.f32 0.0, %v246
  %v351 = vsub.f32 0.0, %v247
  %v352 = vsub.f32 0.0, %v248
  %v353 = vsub.f32 0.0, %v249
  %v354 = vmul.f32 %v346, %v242
  %v355 = vmul.f32 %v347, %v243
  %v356 = vmul.f32 %v348, %v244
  %v357 = vmul.f32 %v349, %v245
  %v358 = vmul.f32 %v350, %v246
  %v359 = vmul.f32 %v351, %v247
  %v360 = vmul.f32 %v352, %v248
  %v361 = vmul.f32 %v353, %v249
  %v362 = vmul.f32 %v354, 1.442695
  %v363 = vpow.pop %v362
  %v364 = vmul.f32 %v355, 1.442695
  %v365 = vpow.pop %v364
  %v366 = vmul.f32 %v356, 1.442695
  %v367 = vpow.pop %v366
  %v368 = vmul.f32 %v357, 1.442695
  %v369 = vpow.pop %v368
  %v370 = vmul.f32 %v358, 1.442695
  %v371 = vpow.pop %v370
  %v372 = vmul.f32 %v359, 1.442695
  %v373 = vpow.pop %v372
  %v374 = vmul.f32 %v360, 1.442695
  %v375 = vpow.pop %v374
  %v376 = vmul.f32 %v361, 1.442695
  %v377 = vpow.pop %v376
  %v378 = vmul.f32 %v338, %v363
  %v379 = vmul.f32 %v339, %v365
  %v380 = vmul.f32 %v340, %v367
  %v381 = vmul.f32 %v341, %v369
  %v382 = vmul.f32 %v342, %v371
  %v383 = vmul.f32 %v343, %v373
  %v384 = vmul.f32 %v344, %v375
  %v385 = vmul.f32 %v345, %v377
  %v386 = vsub.f32 1.0, %v378
  %v387 = vsub.f32 1.0, %v379
  %v388 = vsub.f32 1.0, %v380
  %v389 = vsub.f32 1.0, %v381
  %v390 = vsub.f32 1.0, %v382
  %v391 = vsub.f32 1.0, %v383
  %v392 = vsub.f32 1.0, %v384
  %v393 = vsub.f32 1.0, %v385
  %v394 = vmul.f32 %v234, %v386
  %v395 = vmul.f32 %v235, %v387
  %v396 = vmul.f32 %v236, %v388
  %v397 = vmul.f32 %v237, %v389
  %v398 = vmul.f32 %v238, %v390
  %v399 = vmul.f32 %v239, %v391
  %v400 = vmul.f32 %v240, %v392
  %v401 = vmul.f32 %v241, %v393
  %v402 = vadd.f32 %v394, 1.0
  %v403 = vadd.f32 %v395, 1.0
  %v404 = vadd.f32 %v396, 1.0
  %v405 = vadd.f32 %v397, 1.0
  %v406 = vadd.f32 %v398, 1.0
  %v407 = vadd.f32 %v399, 1.0
  %v408 = vadd.f32 %v400, 1.0
  %v409 = vadd.f32 %v401, 1.0
  %v410 = vmul.f32 %v210, %v402
  %v411 = vmul.f32 %v211, %v403
  %v412 = vmul.f32 %v212, %v404
  %v413 = vmul.f32 %v213, %v405
  %v414 = vmul.f32 %v214, %v406
  %v415 = vmul.f32 %v215, %v407
  %v416 = vmul.f32 %v216, %v408
  %v417 = vmul.f32 %v217, %v409
  %v418 = vld [vmem:[%s3] sm:$0xff]
  %v419 = vld [vmem:[%s3 + $0x8] sm:$0xff]
  %v420 = vld [vmem:[%s3 + $0x10] sm:$0xff]
  %v421 = vld [vmem:[%s3 + $0x18] sm:$0xff]
  %v422 = vld [vmem:[%s4] sm:$0xff]
  %v423 = vld [vmem:[%s4 + $0x8] sm:$0xff]
  %v424 = vld [vmem:[%s4 + $0x10] sm:$0xff]
  %v425 = vld [vmem:[%s4 + $0x18] sm:$0xff]
  %427 = vset.pattern.permute.xlu0 0
  %428 = vperm.xlu0 %427, %v422
  %v429 = vpop.permute.xlu0 %428
  %432 = vset.pattern.permute.xlu0 0
  %433 = vperm.xlu0 %432, %v423
  %v434 = vpop.permute.xlu0 %433
  %437 = vset.pattern.permute.xlu0 0
  %438 = vperm.xlu0 %437, %v424
  %v439 = vpop.permute.xlu0 %438
  %442 = vset.pattern.permute.xlu0 0
  %443 = vperm.xlu0 %442, %v425
  %v444 = vpop.permute.xlu0 %443
  %vm446 = vcmask 523264
  %v448 = vsel %vm446, %v418, 0
  %v451 = vsel %vm446, %v419, 0
  %v454 = vsel %vm446, %v420, 0
  %v457 = vsel %vm446, %v421, 0
  %459 = vmatprep.subr.mxu0 0.0
  %460 = vmatpush1.msra.mxu0 %v410
  %461 = vmatprep.subr.mxu0 0.0
  %462 = vmatpush1.msra.mxu0 %v411
  %463 = vmatprep.subr.mxu0 0.0
  %464 = vmatpush1.msra.mxu0 %v412
  %465 = vmatprep.subr.mxu0 0.0
  %466 = vmatpush1.msra.mxu0 %v413
  %467 = vmatprep.subr.mxu0 0.0
  %468 = vmatpush1.msra.mxu0 %v414
  %469 = vmatprep.subr.mxu0 0.0
  %470 = vmatpush1.msra.mxu0 %v415
  %471 = vmatprep.subr.mxu0 0.0
  %472 = vmatpush1.msra.mxu0 %v416
  %473 = vmatprep.subr.mxu0 0.0
  %474 = vmatpush1.msra.mxu0 %v417
  %475 = vmatprep.subr.mxu0 0.0
  %476 = vmatpush1.msra.mxu0 0.0
  %477 = vmatprep.subr.mxu0 0.0
  %478 = vmatpush1.msra.mxu0 0.0
  %479 = vmatprep.subr.mxu0 0.0
  %480 = vmatpush1.msra.mxu0 0.0
  %481 = vmatprep.subr.mxu0 0.0
  %482 = vmatpush1.msra.mxu0 0.0
  %483 = vmatprep.subr.mxu0 0.0
  %484 = vmatpush1.msra.mxu0 0.0
  %485 = vmatprep.subr.mxu0 0.0
  %486 = vmatpush1.msra.mxu0 0.0
  %487 = vmatprep.subr.mxu0 0.0
  %488 = vmatpush1.msra.mxu0 0.0
  %489 = vmatprep.subr.mxu0 0.0
  %490 = vmatpush1.msra.mxu0 0.0
  %491 = vmatprep.subr.mxu0 0.0
  %492 = vmatpush1.msra.mxu0 0.0
  %493 = vmatprep.subr.mxu0 0.0
  %494 = vmatpush1.msra.mxu0 0.0
  %495 = vmatprep.subr.mxu0 0.0
  %496 = vmatpush1.msra.mxu0 0.0
  %497 = vmatprep.subr.mxu0 0.0
  %498 = vmatpush1.msra.mxu0 0.0
  %499 = vmatprep.subr.mxu0 0.0
  %500 = vmatpush1.msra.mxu0 0.0
  %501 = vmatprep.subr.mxu0 0.0
  %502 = vmatpush1.msra.mxu0 0.0
  %503 = vmatprep.subr.mxu0 0.0
  %504 = vmatpush1.msra.mxu0 0.0
  %505 = vmatprep.subr.mxu0 0.0
  %506 = vmatpush1.msra.mxu0 0.0
  %507 = vmatprep.subr.mxu0 0.0
  %508 = vmatpush1.msra.mxu0 0.0
  %509 = vmatprep.subr.mxu0 0.0
  %510 = vmatpush1.msra.mxu0 0.0
  %511 = vmatprep.subr.mxu0 0.0
  %512 = vmatpush1.msra.mxu0 0.0
  %513 = vmatprep.subr.mxu0 0.0
  %514 = vmatpush1.msra.mxu0 0.0
  %515 = vmatprep.subr.mxu0 0.0
  %516 = vmatpush1.msra.mxu0 0.0
  %517 = vmatprep.subr.mxu0 0.0
  %518 = vmatpush1.msra.mxu0 0.0
  %519 = vmatprep.subr.mxu0 0.0
  %520 = vmatpush1.msra.mxu0 0.0
  %521 = vmatprep.subr.mxu0 0.0
  %522 = vmatpush1.msra.mxu0 0.0
  %523 = vmatprep.mubr.f32.mxu0 0.0
  %524 = vmatmul.mubr.f32.gmra.mrb[0].mxu0 %v448
  %v525 = vpop.f32.mrb[0].mxu0
  %v526 = vadd.f32 %v429, %v525
  %v527 = vpop.f32.mrb[0].mxu0
  %528 = vmatprep.mubr.f32.mxu0 0.0
  %529 = vmatmul.mubr.f32.gmra.mrb[0].mxu0 %v451
  %v530 = vpop.f32.mrb[0].mxu0
  %v531 = vadd.f32 %v434, %v530
  %v532 = vpop.f32.mrb[0].mxu0
  %533 = vmatprep.mubr.f32.mxu0 0.0
  %534 = vmatmul.mubr.f32.gmra.mrb[0].mxu0 %v454
  %v535 = vpop.f32.mrb[0].mxu0
  %v536 = vadd.f32 %v439, %v535
  %v537 = vpop.f32.mrb[0].mxu0
  %538 = vmatprep.mubr.f32.mxu0 0.0
  %539 = vmatmul.mubr.f32.gmra.mrb[0].mxu0 %v457
  %v540 = vpop.f32.mrb[0].mxu0
  %v541 = vadd.f32 %v444, %v540
  %v542 = vpop.f32.mrb[0].mxu0
  %543 = vdwg.mxu0
  %vm544 = vcmask 130048
  %545 = vst.msk [vmem:[%s5] sm:$0xff] %vm544, %v526
  %546 = vst.msk [vmem:[%s5 + $0x8] sm:$0xff] %vm544, %v531
  %547 = vst.msk [vmem:[%s5 + $0x10] sm:$0xff] %vm544, %v536
  %548 = vst.msk [vmem:[%s5 + $0x18] sm:$0xff] %vm544, %v541
  // Predicated region
  $region22: #{tpu_custom_call.1} parent=0 // pred_check
    _
  $region23: #{tpu_custom_call.1} parent=0 // pred_check_branch
    %550 = sbr.rel (0) target = $region25
  $region24: #{tpu_custom_call.1} parent=0 // pred_region
    _
  $region25: #{tpu_custom_call.1} parent=0 // pred_fallthru
    _
  // Predicated region
  $region26: #{tpu_custom_call.1} parent=0 // pred_check
    _
  $region27: #{tpu_custom_call.1} parent=0 // pred_check_branch
    %552 = sbr.rel (0) target = $region29
  $region28: #{tpu_custom_call.1} parent=0 // pred_region
    _
  $region29: #{tpu_custom_call.1} parent=0 // pred_fallthru
    _

</llo_original>
